<compile_context>
chip_gen: v5e
topology: v5e:2x2
jax: 0.10.0
libtpu: 0.0.40
codegen_flags: <defaults>
</compile_context>

<pallas_src>
import jax
import jax.numpy as jnp
from jax.experimental import pallas as pl
from jax.experimental.pallas import tpu as pltpu

LEAKY_SLOPE = 0.01   # nn.LeakyReLU default
BN_EPS = 1e-5        # nn.BatchNorm1d default

# Row indices of the packed per-feature vector operand ([8, hidden] f32).
_ROW_B1, _ROW_B2, _ROW_B3, _ROW_GAMMA, _ROW_BETA, _ROW_W4, _ROW_B4 = range(7)


def _leaky_relu(x):
    return jnp.where(x > 0, x, LEAKY_SLOPE * x)


def mlp_kernel(x_ref, w1_ref, w2_ref, w3_ref, vec_ref, out_ref):
    # Load the packed per-feature vectors ONCE; all later uses slice the
    # in-register value.
    v = vec_ref[...]                               # [8, H] f32

    # x arrives as f32; cast to bf16 in-kernel (cheap pack) so the wrapper
    # issues no per-step cast op.  All dots accumulate in f32 on the MXU.
    x = x_ref[...].astype(jnp.bfloat16)

    h = jnp.dot(x, w1_ref[...], preferred_element_type=jnp.float32)
    h = _leaky_relu(h + v[_ROW_B1:_ROW_B1 + 1, :])

    h = jnp.dot(h.astype(jnp.bfloat16), w2_ref[...],
                preferred_element_type=jnp.float32)
    h = _leaky_relu(h + v[_ROW_B2:_ROW_B2 + 1, :])

    h = jnp.dot(h.astype(jnp.bfloat16), w3_ref[...],
                preferred_element_type=jnp.float32)
    h = _leaky_relu(h + v[_ROW_B3:_ROW_B3 + 1, :])

    # BatchNorm1d, training-mode batch statistics (biased variance), two-pass
    # (subtract-mean) formulation to avoid E[x^2]-E[x]^2 cancellation.
    mean = jnp.mean(h, axis=0, keepdims=True)
    hc = h - mean
    var = jnp.mean(hc * hc, axis=0, keepdims=True)
    scale = v[_ROW_GAMMA:_ROW_GAMMA + 1, :] * jax.lax.rsqrt(var + BN_EPS)
    h = hc * scale + v[_ROW_BETA:_ROW_BETA + 1, :]

    # Final Linear(hidden, 1): VPU broadcast-multiply + lane reduce instead of
    # a 1-lane-wide MXU matmul.
    col = jnp.sum(h * v[_ROW_W4:_ROW_W4 + 1, :], axis=-1, keepdims=True)
    out_ref[...] = (col + v[_ROW_B4:_ROW_B4 + 1, 0:1]).astype(out_ref.dtype)


def prepare_params(params):
    """One-time parameter prep (hoisted out of the per-call forward path):
    bf16 weight casts + packing of all small per-feature vectors into a single
    [8, H] f32 operand (one DMA at call time)."""
    H = params["w2"].shape[0]
    vec = jnp.stack(
        [
            params["b1"],
            params["b2"],
            params["b3"],
            params["gamma"],
            params["beta"],
            params["w4"][:, 0],
            jnp.broadcast_to(params["b4"], (H,)),
            jnp.zeros((H,), jnp.float32),           # pad to 8 sublanes
        ],
        axis=0,
    ).astype(jnp.float32)
    return dict(
        w1=params["w1"].astype(jnp.bfloat16),
        w2=params["w2"].astype(jnp.bfloat16),
        w3=params["w3"].astype(jnp.bfloat16),
        vec=vec,
    )


def properties_prediction_forward(x, prep):
    """x: [B, input_dim] float32; prep: output of prepare_params().
    Exactly one Pallas call, no wrapper-side XLA ops."""
    B = x.shape[0]
    vmem = pltpu.MemorySpace.VMEM
    operands = (x, prep["w1"], prep["w2"], prep["w3"], prep["vec"])
    return pl.pallas_call(
        mlp_kernel,
        out_shape=jax.ShapeDtypeStruct((B, 1), jnp.float32),
        in_specs=[pl.BlockSpec(memory_space=vmem) for _ in operands],
        out_specs=pl.BlockSpec(memory_space=vmem),
    )(*operands)


def init_params(key, input_dim, hidden_size):
    """Deterministic synthetic init. Linear weights stored as [in, out]
    (transposed relative to PyTorch's [out, in])."""
    ks = jax.random.split(key, 8)

    def lin(kw, kb, fan_in, fan_out):
        bound = 1.0 / jnp.sqrt(fan_in)
        w = jax.random.uniform(kw, (fan_in, fan_out), jnp.float32, -bound, bound)
        b = jax.random.uniform(kb, (fan_out,), jnp.float32, -bound, bound)
        return w, b

    w1, b1 = lin(ks[0], ks[1], input_dim, hidden_size)
    w2, b2 = lin(ks[2], ks[3], hidden_size, hidden_size)
    w3, b3 = lin(ks[4], ks[5], hidden_size, hidden_size)
    w4, b4 = lin(ks[6], ks[7], hidden_size, 1)
    gamma = jnp.ones((hidden_size,), jnp.float32)   # BatchNorm1d default weight
    beta = jnp.zeros((hidden_size,), jnp.float32)   # BatchNorm1d default bias
    return dict(w1=w1, b1=b1, w2=w2, b2=b2, w3=w3, b3=b3,
                gamma=gamma, beta=beta, w4=w4, b4=b4)


def reference_forward(x, p):
    """Pure-JAX reference with the SAME dtype handling as the kernel
    (bf16 matmul operands, f32 accumulation / elementwise).
    NOTE: bf16 matmul inputs are a deliberate deviation from PyTorch's full
    f32 numerics (hence the loose tolerance)."""
    w1 = p["w1"].astype(jnp.bfloat16)
    w2 = p["w2"].astype(jnp.bfloat16)
    w3 = p["w3"].astype(jnp.bfloat16)

    h = jnp.dot(x.astype(jnp.bfloat16), w1,
                preferred_element_type=jnp.float32) + p["b1"][None, :]
    h = _leaky_relu(h)
    h = jnp.dot(h.astype(jnp.bfloat16), w2,
                preferred_element_type=jnp.float32) + p["b2"][None, :]
    h = _leaky_relu(h)
    h = jnp.dot(h.astype(jnp.bfloat16), w3,
                preferred_element_type=jnp.float32) + p["b3"][None, :]
    h = _leaky_relu(h)

    mean = jnp.mean(h, axis=0, keepdims=True)
    hc = h - mean
    var = jnp.mean(hc * hc, axis=0, keepdims=True)
    scale = p["gamma"][None, :] * jax.lax.rsqrt(var + BN_EPS)
    h = hc * scale + p["beta"][None, :]

    return (jnp.sum(h * p["w4"][:, 0][None, :], axis=-1, keepdims=True)
            + p["b4"][0])


if __name__ == "__main__":
    B, INPUT_DIM, HIDDEN = 8, 16, 32

    key = jax.random.PRNGKey(0)
    kx, kp = jax.random.split(key)
    x = jax.random.normal(kx, (B, INPUT_DIM), jnp.float32)
    params = init_params(kp, INPUT_DIM, HIDDEN)

    # One-time prep (outside the per-step forward path).
    prep = jax.tree_util.tree_map(jax.block_until_ready, prepare_params(params))

    out = properties_prediction_forward(x, prep)
    out = jax.block_until_ready(out)

    ref = reference_forward(x, params)
    assert out.shape == (B, 1)
    assert jnp.allclose(out, ref, atol=5e-3, rtol=5e-3), "mismatch vs reference"

    print("KERNEL_OK")
</pallas_src>

<mosaic_0001>
module attributes {stable_mosaic.version = 11 : i64} {
  func.func @mlp_kernel(%arg0: memref<8x16xf32, #tpu.memory_space<vmem>>, %arg1: memref<16x32xbf16, #tpu.memory_space<vmem>>, %arg2: memref<32x32xbf16, #tpu.memory_space<vmem>>, %arg3: memref<32x32xbf16, #tpu.memory_space<vmem>>, %arg4: memref<8x32xf32, #tpu.memory_space<vmem>>, %arg5: memref<8x1xf32, #tpu.memory_space<vmem>>) attributes {dimension_semantics = [], scalar_prefetch = 0 : i64, scratch_operands = 0 : i64, tpu.core_type = #tpu.core_type<tc>} {
    %c0 = arith.constant 0 : index
    %c0_0 = arith.constant 0 : index
    %0 = vector.load %arg4[%c0, %c0_0] : memref<8x32xf32, #tpu.memory_space<vmem>>, vector<8x32xf32>
    %c0_1 = arith.constant 0 : index
    %c0_2 = arith.constant 0 : index
    %1 = vector.load %arg0[%c0_1, %c0_2] : memref<8x16xf32, #tpu.memory_space<vmem>>, vector<8x16xf32>
    %2 = arith.truncf %1 : vector<8x16xf32> to vector<8x16xbf16>
    %c0_3 = arith.constant 0 : index
    %c0_4 = arith.constant 0 : index
    %3 = vector.load %arg1[%c0_3, %c0_4] : memref<16x32xbf16, #tpu.memory_space<vmem>>, vector<16x32xbf16>
    %cst = arith.constant dense<0.000000e+00> : vector<8x32xf32>
    %4 = tpu.matmul %2, %3, %cst {dimension_numbers = #tpu.dot_dimension_numbers<[1], [0], [0], [1], [0, 0, 1, 1], [], []>} : vector<8x16xbf16>, vector<16x32xbf16>, vector<8x32xf32> -> vector<8x32xf32>
    %5 = vector.extract_strided_slice %0 {offsets = [0, 0], sizes = [1, 32], strides = [1, 1]} : vector<8x32xf32> to vector<1x32xf32>
    %6 = vector.broadcast %5 : vector<1x32xf32> to vector<8x32xf32>
    %7 = arith.addf %4, %6 : vector<8x32xf32>
    %cst_5 = arith.constant 0.000000e+00 : f32
    %8 = vector.broadcast %cst_5 : f32 to vector<8x32xf32>
    %9 = arith.cmpf ogt, %7, %8 : vector<8x32xf32>
    %cst_6 = arith.constant 0.00999999977 : f32
    %10 = vector.broadcast %cst_6 : f32 to vector<8x32xf32>
    %11 = arith.mulf %10, %7 : vector<8x32xf32>
    %12 = arith.select %9, %7, %11 : vector<8x32xi1>, vector<8x32xf32>
    %13 = arith.truncf %12 : vector<8x32xf32> to vector<8x32xbf16>
    %c0_7 = arith.constant 0 : index
    %c0_8 = arith.constant 0 : index
    %14 = vector.load %arg2[%c0_7, %c0_8] : memref<32x32xbf16, #tpu.memory_space<vmem>>, vector<32x32xbf16>
    %cst_9 = arith.constant dense<0.000000e+00> : vector<8x32xf32>
    %15 = tpu.matmul %13, %14, %cst_9 {dimension_numbers = #tpu.dot_dimension_numbers<[1], [0], [0], [1], [0, 0, 1, 1], [], []>} : vector<8x32xbf16>, vector<32x32xbf16>, vector<8x32xf32> -> vector<8x32xf32>
    %16 = vector.extract_strided_slice %0 {offsets = [1, 0], sizes = [1, 32], strides = [1, 1]} : vector<8x32xf32> to vector<1x32xf32>
    %17 = vector.broadcast %16 : vector<1x32xf32> to vector<8x32xf32>
    %18 = arith.addf %15, %17 : vector<8x32xf32>
    %cst_10 = arith.constant 0.000000e+00 : f32
    %19 = vector.broadcast %cst_10 : f32 to vector<8x32xf32>
    %20 = arith.cmpf ogt, %18, %19 : vector<8x32xf32>
    %cst_11 = arith.constant 0.00999999977 : f32
    %21 = vector.broadcast %cst_11 : f32 to vector<8x32xf32>
    %22 = arith.mulf %21, %18 : vector<8x32xf32>
    %23 = arith.select %20, %18, %22 : vector<8x32xi1>, vector<8x32xf32>
    %24 = arith.truncf %23 : vector<8x32xf32> to vector<8x32xbf16>
    %c0_12 = arith.constant 0 : index
    %c0_13 = arith.constant 0 : index
    %25 = vector.load %arg3[%c0_12, %c0_13] : memref<32x32xbf16, #tpu.memory_space<vmem>>, vector<32x32xbf16>
    %cst_14 = arith.constant dense<0.000000e+00> : vector<8x32xf32>
    %26 = tpu.matmul %24, %25, %cst_14 {dimension_numbers = #tpu.dot_dimension_numbers<[1], [0], [0], [1], [0, 0, 1, 1], [], []>} : vector<8x32xbf16>, vector<32x32xbf16>, vector<8x32xf32> -> vector<8x32xf32>
    %27 = vector.extract_strided_slice %0 {offsets = [2, 0], sizes = [1, 32], strides = [1, 1]} : vector<8x32xf32> to vector<1x32xf32>
    %28 = vector.broadcast %27 : vector<1x32xf32> to vector<8x32xf32>
    %29 = arith.addf %26, %28 : vector<8x32xf32>
    %cst_15 = arith.constant 0.000000e+00 : f32
    %30 = vector.broadcast %cst_15 : f32 to vector<8x32xf32>
    %31 = arith.cmpf ogt, %29, %30 : vector<8x32xf32>
    %cst_16 = arith.constant 0.00999999977 : f32
    %32 = vector.broadcast %cst_16 : f32 to vector<8x32xf32>
    %33 = arith.mulf %32, %29 : vector<8x32xf32>
    %34 = arith.select %31, %29, %33 : vector<8x32xi1>, vector<8x32xf32>
    %cst_17 = arith.constant dense<0.000000e+00> : vector<32xf32>
    %35 = vector.multi_reduction <add>, %34, %cst_17 [0] : vector<8x32xf32> to vector<32xf32>
    %36 = vector.shape_cast %35 : vector<32xf32> to vector<1x32xf32>
    %cst_18 = arith.constant 8.000000e+00 : f32
    %37 = vector.broadcast %cst_18 : f32 to vector<1x32xf32>
    %38 = arith.divf %36, %37 : vector<1x32xf32>
    %39 = vector.broadcast %38 : vector<1x32xf32> to vector<8x32xf32>
    %40 = arith.subf %34, %39 : vector<8x32xf32>
    %41 = arith.mulf %40, %40 : vector<8x32xf32>
    %cst_19 = arith.constant dense<0.000000e+00> : vector<32xf32>
    %42 = vector.multi_reduction <add>, %41, %cst_19 [0] : vector<8x32xf32> to vector<32xf32>
    %43 = vector.shape_cast %42 : vector<32xf32> to vector<1x32xf32>
    %cst_20 = arith.constant 8.000000e+00 : f32
    %44 = vector.broadcast %cst_20 : f32 to vector<1x32xf32>
    %45 = arith.divf %43, %44 : vector<1x32xf32>
    %46 = vector.extract_strided_slice %0 {offsets = [3, 0], sizes = [1, 32], strides = [1, 1]} : vector<8x32xf32> to vector<1x32xf32>
    %cst_21 = arith.constant 9.99999974E-6 : f32
    %47 = vector.broadcast %cst_21 : f32 to vector<1x32xf32>
    %48 = arith.addf %45, %47 : vector<1x32xf32>
    %49 = math.rsqrt %48 : vector<1x32xf32>
    %50 = arith.mulf %46, %49 : vector<1x32xf32>
    %51 = vector.broadcast %50 : vector<1x32xf32> to vector<8x32xf32>
    %52 = arith.mulf %40, %51 : vector<8x32xf32>
    %53 = vector.extract_strided_slice %0 {offsets = [4, 0], sizes = [1, 32], strides = [1, 1]} : vector<8x32xf32> to vector<1x32xf32>
    %54 = vector.broadcast %53 : vector<1x32xf32> to vector<8x32xf32>
    %55 = arith.addf %52, %54 : vector<8x32xf32>
    %56 = vector.extract_strided_slice %0 {offsets = [5, 0], sizes = [1, 32], strides = [1, 1]} : vector<8x32xf32> to vector<1x32xf32>
    %57 = vector.broadcast %56 : vector<1x32xf32> to vector<8x32xf32>
    %58 = arith.mulf %55, %57 : vector<8x32xf32>
    %cst_22 = arith.constant dense<0.000000e+00> : vector<8xf32>
    %59 = vector.multi_reduction <add>, %58, %cst_22 [1] : vector<8x32xf32> to vector<8xf32>
    %60 = vector.shape_cast %59 : vector<8xf32> to vector<8x1xf32>
    %61 = vector.extract_strided_slice %0 {offsets = [6, 0], sizes = [1, 1], strides = [1, 1]} : vector<8x32xf32> to vector<1x1xf32>
    %62 = vector.broadcast %61 : vector<1x1xf32> to vector<8x1xf32>
    %63 = arith.addf %60, %62 : vector<8x1xf32>
    %c0_23 = arith.constant 0 : index
    %c0_24 = arith.constant 0 : index
    %64 = vector.load %arg5[%c0_23, %c0_24] : memref<8x1xf32, #tpu.memory_space<vmem>>, vector<8x1xf32>
    tpu.vector_store %arg5[%c0_23, %c0_24], %63 {strides = array<i32>} : memref<8x1xf32, #tpu.memory_space<vmem>>, vector<8x1xf32>,
    return
  }
}

</mosaic_0001>

<llo_original>
// kernel: tpu_custom_call.1
$region0: #{tpu_custom_call.1}
  #allocation0 [shape = 'u32[]', space=smem, size = 0x4, offset = 0x4, fixed_abs, tag = 'smem constant byte address 0x4 - core index']
  #allocation1 [shape = 'u32[72,128]{1,0:T(1,128)}', space=vmem, size = 0x9000, scoped, tag = 'internal scratch']
  %s0 = inlined_call_operand.hbm [shape: f32[8,16], index: 0, kind: input, shape index: {}]
  %s1 = inlined_call_operand.hbm [shape: bf16[16,32], index: 1, kind: input, shape index: {}]
  %s2 = inlined_call_operand.hbm [shape: bf16[32,32], index: 2, kind: input, shape index: {}]
  %s3 = inlined_call_operand.hbm [shape: bf16[32,32], index: 3, kind: input, shape index: {}]
  %s4 = inlined_call_operand.hbm [shape: f32[8,32], index: 4, kind: input, shape index: {}]
  %s5 = inlined_call_operand.vmem [shape: f32[8,1], index: 5, kind: output, shape index: {}]
  %s6 = sld [smem:[#allocation0]]
  $region50: #{tpu_custom_call.1} parent=0
    _
  %s8 = ssub.s32 1, %s6
  %s9 = scalar_select 0, %s8, %s6
  $region1: #{tpu_custom_call.1} parent=0
    #allocation2 [shape = 'u8[4096]{0}', space=vmem, size = 0x1000, scoped, tag = 'input window, operand 0, single buffered']
    #allocation3 [shape = 's32[1]{0}', space=sflag, size = 0x4, scoped, tag = 'scoped memory for tpu_custom_call.1']
    #allocation4 [shape = 'u8[4096]{0}', space=vmem, size = 0x1000, scoped, tag = 'input window, operand 1, single buffered']
    #allocation5 [shape = 's32[1]{0}', space=sflag, size = 0x4, scoped, tag = 'scoped memory for tpu_custom_call.1']
    #allocation6 [shape = 'u8[8192]{0}', space=vmem, size = 0x2000, scoped, tag = 'input window, operand 2, single buffered']
    #allocation7 [shape = 'u8[8192]{0}', space=vmem, size = 0x2000, scoped, tag = 'input window, operand 3, single buffered']
    #allocation8 [shape = 's32[1]{0}', space=sflag, size = 0x4, scoped, tag = 'scoped memory for tpu_custom_call.1']
    #allocation9 [shape = 'u8[4096]{0}', space=vmem, size = 0x1000, scoped, tag = 'input window, operand 4, single buffered']
    %10 = vsyncpa [#allocation3], 0
    %11 = vsyncpa [#allocation5], 0
    %12 = vsyncpa [#allocation8], 0
    // Predicated region
    $region2: #{tpu_custom_call.1} parent=1 // pred_check
      _
    $region3: #{tpu_custom_call.1} parent=1 // pred_check_branch
      %14 = sbr.rel (0) target = $region5
    $region4: #{tpu_custom_call.1} parent=1 // pred_region
      %16 = vsyncadd [#allocation3], 0
      %s18 = sshll.u32 %s0, 4
      %s19 = int_to_ptr.hbm [resolvable:$true] %s18
      %s20 = sshll.u32 [#allocation2], 4
      %s21 = int_to_ptr.vmem [resolvable:$true] %s20
      %23 = dma.hbm_to_vmem [thread:$0]  %s19, 128, %s21, [#allocation3]
    $region5: #{tpu_custom_call.1} parent=1 // pred_fallthru
      _
    // Predicated region
    $region6: #{tpu_custom_call.1} parent=1 // pred_check
      _
    $region7: #{tpu_custom_call.1} parent=1 // pred_check_branch
      %25 = sbr.rel (0) target = $region9
    $region8: #{tpu_custom_call.1} parent=1 // pred_region
      %27 = vsyncadd [#allocation5], 0
      %s28 = sshll.u32 %s1, 4
      %s29 = int_to_ptr.hbm [resolvable:$true] %s28
      %s30 = sshll.u32 [#allocation4], 4
      %s31 = int_to_ptr.vmem [resolvable:$true] %s30
      %36 = dma.hbm_to_vmem [thread:$0]  %s29, 128, %s31, [#allocation5], 64, 64, 4
    $region9: #{tpu_custom_call.1} parent=1 // pred_fallthru
      _
    // Predicated region
    $region10: #{tpu_custom_call.1} parent=1 // pred_check
      _
    $region11: #{tpu_custom_call.1} parent=1 // pred_check_branch
      %38 = sbr.rel (0) target = $region13
    $region12: #{tpu_custom_call.1} parent=1 // pred_region
      %40 = vsyncadd [#allocation5], 0
      %s41 = sshll.u32 %s2, 4
      %s42 = int_to_ptr.hbm [resolvable:$true] %s41
      %s43 = sshll.u32 [#allocation6], 4
      %s44 = int_to_ptr.vmem [resolvable:$true] %s43
      %49 = dma.hbm_to_vmem [thread:$0]  %s42, 256, %s44, [#allocation5], 64, 64, 4
    $region13: #{tpu_custom_call.1} parent=1 // pred_fallthru
      _
    // Predicated region
    $region14: #{tpu_custom_call.1} parent=1 // pred_check
      _
    $region15: #{tpu_custom_call.1} parent=1 // pred_check_branch
      %51 = sbr.rel (0) target = $region17
    $region16: #{tpu_custom_call.1} parent=1 // pred_region
      %53 = vsyncadd [#allocation8], 0
      %s54 = sshll.u32 %s3, 4
      %s55 = int_to_ptr.hbm [resolvable:$true] %s54
      %s56 = sshll.u32 [#allocation7], 4
      %s57 = int_to_ptr.vmem [resolvable:$true] %s56
      %62 = dma.hbm_to_vmem [thread:$0]  %s55, 256, %s57, [#allocation8], 64, 64, 4
    $region17: #{tpu_custom_call.1} parent=1 // pred_fallthru
      _
    // Predicated region
    $region18: #{tpu_custom_call.1} parent=1 // pred_check
      _
    $region19: #{tpu_custom_call.1} parent=1 // pred_check_branch
      %64 = sbr.rel (0) target = $region21
    $region20: #{tpu_custom_call.1} parent=1 // pred_region
      %66 = vsyncadd [#allocation8], 0
      %s68 = sshll.u32 %s4, 4
      %s69 = int_to_ptr.hbm [resolvable:$true] %s68
      %s70 = sshll.u32 [#allocation9], 4
      %s71 = int_to_ptr.vmem [resolvable:$true] %s70
      %73 = dma.hbm_to_vmem [thread:$0]  %s69, 128, %s71, [#allocation8]
    $region21: #{tpu_custom_call.1} parent=1 // pred_fallthru
      _
    // Predicated region
    $region22: #{tpu_custom_call.1} parent=1 // pred_check
      _
    $region23: #{tpu_custom_call.1} parent=1 // pred_check_branch
      %75 = sbr.rel (0) target = $region25
    $region24: #{tpu_custom_call.1} parent=1 // pred_region
      %77 = dma.done [#allocation3], 128
    $region25: #{tpu_custom_call.1} parent=1 // pred_fallthru
      _
    // Predicated region
    $region26: #{tpu_custom_call.1} parent=1 // pred_check
      _
    $region27: #{tpu_custom_call.1} parent=1 // pred_check_branch
      %79 = sbr.rel (0) target = $region29
    $region28: #{tpu_custom_call.1} parent=1 // pred_region
      %81 = dma.done [#allocation5], 128
    $region29: #{tpu_custom_call.1} parent=1 // pred_fallthru
      _
    // Predicated region
    $region30: #{tpu_custom_call.1} parent=1 // pred_check
      _
    $region31: #{tpu_custom_call.1} parent=1 // pred_check_branch
      %83 = sbr.rel (0) target = $region33
    $region32: #{tpu_custom_call.1} parent=1 // pred_region
      %85 = dma.done [#allocation5], 256
    $region33: #{tpu_custom_call.1} parent=1 // pred_fallthru
      _
    // Predicated region
    $region34: #{tpu_custom_call.1} parent=1 // pred_check
      _
    $region35: #{tpu_custom_call.1} parent=1 // pred_check_branch
      %87 = sbr.rel (0) target = $region37
    $region36: #{tpu_custom_call.1} parent=1 // pred_region
      %89 = dma.done [#allocation8], 256
    $region37: #{tpu_custom_call.1} parent=1 // pred_fallthru
      _
    // Predicated region
    $region38: #{tpu_custom_call.1} parent=1 // pred_check
      _
    $region39: #{tpu_custom_call.1} parent=1 // pred_check_branch
      %91 = sbr.rel (0) target = $region41
    $region40: #{tpu_custom_call.1} parent=1 // pred_region
      %93 = dma.done [#allocation8], 128
    $region41: #{tpu_custom_call.1} parent=1 // pred_fallthru
      _
    %v95 = vld [vmem:[#allocation9] sm:$0xff]
    %v96 = vld [vmem:[#allocation2] sm:$0xff]
    %v97 = vpack.c.bf16 %v96, %v96
    %v98 = vld [vmem:[#allocation4] sm:$0xf]
    %v99 = vld [vmem:[#allocation4 + $0x4] sm:$0xf]
    %v100 = vperm.slane %v95, 0
    %v103 = vunpack.c.l.b16 %v98
    %v104 = vunpack.c.l.b16 %v99
    %v105 = vpack.c.b16 %v104, %v103
    %vm107 = vcmask 130048
    %v109 = vsel %vm107, %v97, 0
    %111 = vmatpush.bf16.msra.mxu0 0
    %112 = vmatpush.bf16.msra.mxu0 0
    %113 = vmatpush.bf16.msra.mxu0 0
    %114 = vmatpush.bf16.msra.mxu0 0
    %115 = vmatpush.bf16.msra.mxu0 0
    %116 = vmatpush.bf16.msra.mxu0 0
    %117 = vmatpush.bf16.msra.mxu0 0
    %118 = vmatpush.bf16.msra.mxu0 %v105
    %119 = vmatmul.bf16.gmra.mxu0 %v109
    %v120 = vpop.f32.mrf.mxu0
    %v121 = vadd.f32 %v100, %v120
    %v122 = vpop.f32.mrf.mxu0
    %123 = vdwg.mxu0
    %vm124 = vcmp.gt.f32.partialorder %v121, 0.0
    %v125 = vmul.f32 %v121, 0.01
    %v126 = vsel %vm124, %v121, %v125
    %v127 = vpack.c.bf16 %v126, %v126
    %v128 = vld [vmem:[#allocation6] sm:$0xf]
    %v129 = vld [vmem:[#allocation6 + $0x4] sm:$0xf]
    %v130 = vld [vmem:[#allocation6 + $0x8] sm:$0xf]
    %v131 = vld [vmem:[#allocation6 + $0xc] sm:$0xf]
    %v132 = vperm.slane %v95, 1
    %v137 = vunpack.c.l.b16 %v128
    %v138 = vunpack.c.l.b16 %v129
    %v139 = vunpack.c.l.b16 %v130
    %v140 = vunpack.c.l.b16 %v131
    %v141 = vpack.c.b16 %v138, %v137
    %v142 = vpack.c.b16 %v140, %v139
    %vm145 = vcmask 261120
    %v147 = vsel %vm145, %v127, 0
    %149 = vmatpush.bf16.msra.mxu0 0
    %150 = vmatpush.bf16.msra.mxu0 0
    %151 = vmatpush.bf16.msra.mxu0 0
    %152 = vmatpush.bf16.msra.mxu0 0
    %153 = vmatpush.bf16.msra.mxu0 0
    %154 = vmatpush.bf16.msra.mxu0 0
    %155 = vmatpush.bf16.msra.mxu0 %v142
    %156 = vmatpush.bf16.msra.mxu0 %v141
    %157 = vmatmul.bf16.gmra.mxu0 %v147
    %v158 = vpop.f32.mrf.mxu0
    %v159 = vadd.f32 %v132, %v158
    %v160 = vpop.f32.mrf.mxu0
    %161 = vdwg.mxu0
    %vm162 = vcmp.gt.f32.partialorder %v159, 0.0
    %v163 = vmul.f32 %v159, 0.01
    %v164 = vsel %vm162, %v159, %v163
    %v165 = vpack.c.bf16 %v164, %v164
    %v166 = vld [vmem:[#allocation7] sm:$0xf]
    %v167 = vld [vmem:[#allocation7 + $0x4] sm:$0xf]
    %v168 = vld [vmem:[#allocation7 + $0x8] sm:$0xf]
    %v169 = vld [vmem:[#allocation7 + $0xc] sm:$0xf]
    %v170 = vperm.slane %v95, 2
    %v175 = vunpack.c.l.b16 %v166
    %v176 = vunpack.c.l.b16 %v167
    %v177 = vunpack.c.l.b16 %v168
    %v178 = vunpack.c.l.b16 %v169
    %v179 = vpack.c.b16 %v176, %v175
    %v180 = vpack.c.b16 %v178, %v177
    %v184 = vsel %vm145, %v165, 0
    %186 = vmatpush.bf16.msra.mxu0 0
    %187 = vmatpush.bf16.msra.mxu0 0
    %188 = vmatpush.bf16.msra.mxu0 0
    %189 = vmatpush.bf16.msra.mxu0 0
    %190 = vmatpush.bf16.msra.mxu0 0
    %191 = vmatpush.bf16.msra.mxu0 0
    %192 = vmatpush.bf16.msra.mxu0 %v180
    %193 = vmatpush.bf16.msra.mxu0 %v179
    %194 = vmatmul.bf16.gmra.mxu0 %v184
    %v195 = vpop.f32.mrf.mxu0
    %v196 = vadd.f32 %v170, %v195
    %v197 = vpop.f32.mrf.mxu0
    %198 = vdwg.mxu0
    %vm199 = vcmp.gt.f32.partialorder %v196, 0.0
    %v200 = vmul.f32 %v196, 0.01
    %v201 = vsel %vm199, %v196, %v200
    %v202 = vsel %vm145, %v201, 0.0
    %v203 = vrot.slane %v202, 4
    %v204 = vadd.f32 %v202, %v203
    %v205 = vrot.slane %v204, 2
    %v206 = vadd.f32 %v204, %v205
    %v207 = vrot.slane %v206, 1
    %v208 = vadd.f32 %v206, %v207
    %v209 = vrcp.pop 8.0
    %v210 = vmul.f32 8.0, %v209
    %v211 = vsub.f32 1.0, %v210
    %v212 = vmul.f32 %v209, %v211
    %v213 = vadd.f32 %v209, %v212
    %vm214 = vweird.f32 %v209
    %v215 = vsel %vm214, %v209, %v213
    %v216 = vmul.f32 %v208, %v215
    %v217 = vsub.f32 %v201, %v216
    %v218 = vmul.f32 %v217, %v217
    %v219 = vsel %vm145, %v218, 0.0
    %v220 = vrot.slane %v219, 4
    %v221 = vadd.f32 %v219, %v220
    %v222 = vrot.slane %v221, 2
    %v223 = vadd.f32 %v221, %v222
    %v224 = vrot.slane %v223, 1
    %v225 = vadd.f32 %v223, %v224
    %v226 = vmul.f32 %v225, %v215
    %v227 = vadd.f32 %v226, 1e-05
    %v228 = vrsqrt.pop %v227
    %v229 = vmul.f32 %v228, %v227
    %v230 = vmul.f32 %v229, %v228
    %v231 = vmul.f32 0.5, %v230
    %v232 = vsub.f32 1.5, %v231
    %v233 = vmul.f32 %v228, %v232
    %vm234 = vweird.f32 %v227
    %vm235 = vweird.f32 %v228
    %vm236 = vmor %vm234, %vm235
    %v237 = vsel %vm236, %v228, %v233
    %v238 = vmul.f32 %v95, %v237
    %v239 = vperm.slane %v238, 3
    %v240 = vmul.f32 %v217, %v239
    %v241 = vperm.slane %v95, 4
    %v242 = vadd.f32 %v240, %v241
    %v243 = vperm.slane %v95, 5
    %v244 = vmul.f32 %v242, %v243
    %v245 = vsel %vm145, %v244, 0.0
    %246 = vadd.xlane.f32.xlu0 %v245
    %v247 = vpop.xlane.xlu0 %246
    %v248 = vperm.slane %v95, 6
    %v249 = vadd.f32 %v247, %v248
    %vm250 = vcmask 7168
    %251 = vst.msk [vmem:[%s5] sm:$0xff] %vm250, %v249
    // Predicated region
    $region42: #{tpu_custom_call.1} parent=1 // pred_check
      _
    $region43: #{tpu_custom_call.1} parent=1 // pred_check_branch
      %253 = sbr.rel (0) target = $region45
    $region44: #{tpu_custom_call.1} parent=1 // pred_region
      _
    $region45: #{tpu_custom_call.1} parent=1 // pred_fallthru
      _
    // Predicated region
    $region46: #{tpu_custom_call.1} parent=1 // pred_check
      _
    $region47: #{tpu_custom_call.1} parent=1 // pred_check_branch
      %255 = sbr.rel (0) target = $region49
    $region48: #{tpu_custom_call.1} parent=1 // pred_region
      _
    $region49: #{tpu_custom_call.1} parent=1 // pred_fallthru
      _
    %256 = vsyncpa [#allocation3], 1
    %257 = vsyncpa [#allocation5], 1
    %258 = vsyncpa [#allocation8], 1

</llo_original>
